<compile_context>
chip_gen: v7x
topology: tpu7x:2x2x1
jax: 0.10.0
libtpu: 0.0.40
codegen_flags: <defaults>
</compile_context>

<pallas_src>
import functools
import math

import numpy as np
import jax
import jax.numpy as jnp
from jax.experimental import pallas as pl
from jax.experimental.pallas import tpu as pltpu


EXP_NEG30 = math.exp(-30.0)


def _round_up(x, m):
    return ((x + m - 1) // m) * m


# -----------------------------------------------------------------------------
# Fused Pallas kernel: Model_COS hot path + MLP_COS submodule
# -----------------------------------------------------------------------------
def fused_model_cos_kernel(act_ref, w_ref, w1x_ref, out_ref, *,
                           G, T, D, OUT_W,
                           VEC_OFF, PRED_OFF, PX_OFF, PY_OFF, VX_OFF, VY_OFF,
                           PSI_OFF, T_OFF, V0_OFF):
    # ---------------- Model_COS: geometric attention features ----------------
    px = act_ref[:, PX_OFF:PX_OFF + G]                    # (Bt, G)
    py = act_ref[:, PY_OFF:PY_OFF + G]
    vx = act_ref[:, VX_OFF:VX_OFF + G]
    vy = act_ref[:, VY_OFF:VY_OFF + G]
    psi = act_ref[:, PSI_OFF:PSI_OFF + G]

    psi_d = jnp.abs(psi - psi[:, 0:1])
    dir_keep = (psi_d < 2.7) | (psi_d > 3.5)

    dx = px - px[:, 0:1]
    dy = py - py[:, 0:1]
    dis_score = jnp.exp(-jnp.sqrt(dx * dx + dy * dy))
    dis_score = jnp.where(dis_score < EXP_NEG30, 0.0, dis_score)
    dis_score = jnp.where(dir_keep, dis_score, 0.0)

    dvx = vx - vx[:, 0:1]
    dvy = vy - vy[:, 0:1]
    vel_dis = jnp.sqrt(dvx * dvx + dvy * dvy)

    # situ_pro Linear(2G, 2) as VPU multiply + lane reduce (MXU ~0% utilized).
    l0 = (jnp.sum(dis_score * w_ref[5:6, 0:G] + vel_dis * w_ref[6:7, 0:G],
                  axis=-1, keepdims=True) + w_ref[9:10, 0:1])
    l1 = (jnp.sum(dis_score * w_ref[7:8, 0:G] + vel_dis * w_ref[8:9, 0:G],
                  axis=-1, keepdims=True) + w_ref[9:10, 1:2])

    # 2-way softmax == sigmoid(l0 - l1), numerically stable form.
    z = l0 - l1
    ez = jnp.exp(-jnp.abs(z))
    alpha = jnp.where(z >= 0.0, 1.0, ez) / (1.0 + ez)     # (Bt, 1)
    beta = 1.0 - alpha

    # Blended trajectory, lane-dense (pad lanes of vec/pred are zero).
    blend = (alpha * act_ref[:, VEC_OFF:VEC_OFF + OUT_W]
             + beta * act_ref[:, PRED_OFF:PRED_OFF + OUT_W])   # (Bt, OUT_W)

    # ---------------- MLP_COS: Linear(258,256) -> cos -> Linear(256,2) -------
    x = act_ref[:, 0:D]
    if w1x_ref.dtype == jnp.bfloat16:                     # optional MXU-native path
        x = x.astype(jnp.bfloat16)
    h = (jnp.dot(x, w1x_ref[...], preferred_element_type=jnp.float32)
         + act_ref[:, T_OFF:T_OFF + 1] * w_ref[0:1, :]    # rank-1 VPU updates
         + act_ref[:, V0_OFF:V0_OFF + 1] * w_ref[1:2, :]
         + w_ref[2:3, :])                                  # (Bt, 256)
    h = jnp.cos(h)

    # Linear(256, 2) as two VPU/XLU lane reductions (right choice at small Bt;
    # switch to a padded MXU dot_general once Bt >~ 512 and the XLU saturates).
    mlp0 = jnp.sum(h * w_ref[3:4, :], axis=-1, keepdims=True) + w_ref[9:10, 2:3]
    mlp1 = jnp.sum(h * w_ref[4:5, :], axis=-1, keepdims=True) + w_ref[9:10, 3:4]

    # ---------------- single lane-dense, full-width output store -------------
    col = jax.lax.broadcasted_iota(jnp.int32, (blend.shape[0], OUT_W), 1)
    tail = (jnp.where(col == 2 * T, alpha, 0.0)
            + jnp.where(col == 2 * T + 1, beta, 0.0)
            + jnp.where(col == 2 * T + 2, mlp0, 0.0)
            + jnp.where(col == 2 * T + 3, mlp1, 0.0))
    out_ref[...] = blend + tail


# -----------------------------------------------------------------------------
# Wrapper: slab packing (free layout plumbing) + single fused pallas_call
# -----------------------------------------------------------------------------
def model_cos_fused_forward(pos, vel, psi, w_situ, b_situ, vec_pre, predictions,
                            x_mlp, t_mlp, v0_mlp, w1, b1, w5, b5,
                            *, use_bf16_matmul=False):
    """Returns (final_trace (B,T,2), two_pra (B,2), mlp_out (B,2))."""
    f32 = jnp.float32
    B, G, _ = pos.shape
    T = vec_pre.shape[1]
    D = x_mlp.shape[1]                                     # 256
    OUT_W = _round_up(2 * T + 4, 128)                      # 128 for T=30

    # ----- activation slab layout (lanes) -----
    VEC_OFF = D
    PRED_OFF = D + OUT_W
    PX_OFF = D + 2 * OUT_W
    PY_OFF = PX_OFF + G
    VX_OFF = PY_OFF + G
    VY_OFF = VX_OFF + G
    PSI_OFF = VY_OFF + G
    T_OFF = PSI_OFF + G
    V0_OFF = T_OFF + 1
    USED = V0_OFF + 1
    ACT_W = _round_up(USED, 128)

    px, py = pos[:, :, 0], pos[:, :, 1]
    vx, vy = vel[:, :, 0], vel[:, :, 1]
    vec_pad = jnp.pad(vec_pre.reshape(B, 2 * T), ((0, 0), (0, OUT_W - 2 * T)))
    pred_pad = jnp.pad(predictions.reshape(B, 2 * T), ((0, 0), (0, OUT_W - 2 * T)))

    pieces = [x_mlp.astype(f32), vec_pad, pred_pad, px, py, vx, vy, psi,
              t_mlp, v0_mlp]
    if ACT_W > USED:
        pieces.append(jnp.zeros((B, ACT_W - USED), f32))
    act = jnp.concatenate(pieces, axis=-1)                 # (B, ACT_W)

    # ----- small weight slab (10, 256) -----
    def pad_row(v):
        return jnp.pad(v.astype(f32), (0, D - v.shape[0]))

    wslab = jnp.stack([
        w1[D, :], w1[D + 1, :], b1[0],                     # rows 0-2
        w5[:, 0], w5[:, 1],                                # rows 3-4
        pad_row(w_situ[:G, 0]), pad_row(w_situ[G:, 0]),    # rows 5-6
        pad_row(w_situ[:G, 1]), pad_row(w_situ[G:, 1]),    # rows 7-8
        pad_row(jnp.stack([b_situ[0, 0], b_situ[0, 1],     # row 9: 4 scalars
                           b5[0, 0], b5[0, 1]])),
    ], axis=0)                                             # (10, D)

    w1x = w1[:D, :]
    if use_bf16_matmul:                                    # v6e/v7x native MXU path
        w1x = w1x.astype(jnp.bfloat16)

    # ----- grid over B (parallel); weights resident across steps -----
    B_TILE = B if B <= 512 else 512
    grid = (pl.cdiv(B, B_TILE),)

    kernel = functools.partial(
        fused_model_cos_kernel,
        G=G, T=T, D=D, OUT_W=OUT_W,
        VEC_OFF=VEC_OFF, PRED_OFF=PRED_OFF, PX_OFF=PX_OFF, PY_OFF=PY_OFF,
        VX_OFF=VX_OFF, VY_OFF=VY_OFF, PSI_OFF=PSI_OFF, T_OFF=T_OFF,
        V0_OFF=V0_OFF)

    bytes_in = (act.size * act.dtype.itemsize
                + wslab.size * wslab.dtype.itemsize
                + w1x.size * w1x.dtype.itemsize)
    cost = pl.CostEstimate(
        flops=2 * B * D * D + 8 * B * D + 30 * B * G + 6 * B * OUT_W,
        transcendentals=B * G + B + B * D,
        bytes_accessed=int(bytes_in + B * OUT_W * 4))

    out = pl.pallas_call(
        kernel,
        out_shape=jax.ShapeDtypeStruct((B, OUT_W), f32),
        grid_spec=pltpu.PrefetchScalarGridSpec(
            num_scalar_prefetch=0,
            grid=grid,
            in_specs=[
                pl.BlockSpec((B_TILE, ACT_W), lambda i: (i, 0)),   # per-row slab
                pl.BlockSpec((10, D), lambda i: (0, 0)),           # resident
                pl.BlockSpec((D, D), lambda i: (0, 0)),            # resident
            ],
            out_specs=pl.BlockSpec((B_TILE, OUT_W), lambda i: (i, 0)),
        ),
        compiler_params=pltpu.CompilerParams(
            dimension_semantics=("parallel",)),
        cost_estimate=cost,
    )(act, wslab, w1x)

    final_trace = out[:, :2 * T].reshape(B, T, 2)
    two_pra = out[:, 2 * T:2 * T + 2]
    mlp_out = out[:, 2 * T + 2:2 * T + 4]
    return final_trace, two_pra, mlp_out


# -----------------------------------------------------------------------------
# Pure-JAX references (for correctness checking)
# -----------------------------------------------------------------------------
def model_cos_ref(pos, vel, psi, w, b, vec_pre, pred):
    psi_d = jnp.abs(psi - psi[:, 0:1])
    dir_att = jnp.where((psi_d < 2.7) | (psi_d > 3.5), 1.0, 0.0)
    dis = jnp.sqrt(jnp.sum((pos - pos[:, 0:1, :]) ** 2, axis=-1))
    dis_score = jnp.exp(-dis)
    dis_score = jnp.where(dis_score < EXP_NEG30, 0.0, dis_score)
    dis_score = jnp.where(dir_att == 0.0, 0.0, dis_score)
    vel_dis = jnp.sqrt(jnp.sum((vel - vel[:, 0:1, :]) ** 2, axis=-1))
    status = jnp.concatenate([dis_score, vel_dis], axis=1)
    two = jax.nn.softmax(status @ w + b[0], axis=-1)
    out = two[:, 0:1, None] * vec_pre + two[:, 1:2, None] * pred
    return out, two


def mlp_cos_ref(x, t, v0, w1, b1, w5, b5):
    xt = jnp.concatenate([x, t, v0], axis=1)
    h = jnp.cos(xt @ w1 + b1[0])
    return h @ w5 + b5[0]


# -----------------------------------------------------------------------------
# Host-side glue: data-dependent interval extraction (mirrors the PyTorch loop)
# -----------------------------------------------------------------------------
def extract_groups(x0_np):
    B, vNum, _ = x0_np.shape
    pids = x0_np[0, :, -1]
    last_pid = pids[0]
    intervals = [0]
    for i in range(vNum):
        if last_pid != pids[i]:
            last_pid = pids[i]
            intervals.append(i)
    intervals.append(vNum)
    pos, vel, psi_l = [], [], []
    for i in range(len(intervals) - 1):
        if np.sum(x0_np[:, intervals[i], 4]) == B:
            pos.append(x0_np[:, intervals[i + 1] - 1, 0:2])
            vel.append(x0_np[:, intervals[i + 1] - 1, 6:8])
            psi_l.append(x0_np[:, intervals[i + 1] - 1, 11])
        else:
            break
    return (np.stack(pos, axis=1).astype(np.float32),
            np.stack(vel, axis=1).astype(np.float32),
            np.stack(psi_l, axis=1).astype(np.float32))


# -----------------------------------------------------------------------------
# Deterministic parameter init (matches the PyTorch inits)
# -----------------------------------------------------------------------------
def kaiming_uniform_tanh(key, fan_in, fan_out):
    gain = 5.0 / 3.0
    bound = gain * math.sqrt(3.0 / fan_in)
    # stored transposed: (fan_in, fan_out) so the kernel does x @ W
    return jax.random.uniform(key, (fan_in, fan_out), jnp.float32,
                              minval=-bound, maxval=bound)


def default_linear(key, fan_in, fan_out):
    bound = 1.0 / math.sqrt(fan_in)
    kw, kb = jax.random.split(key)
    w = jax.random.uniform(kw, (fan_in, fan_out), jnp.float32, -bound, bound)
    b = jax.random.uniform(kb, (1, fan_out), jnp.float32, -bound, bound)
    return w, b


if __name__ == "__main__":
    key = jax.random.PRNGKey(0)
    ks = jax.random.split(key, 12)

    # ------------------ Model_COS inputs ------------------
    B, G, F, T = 2, 13, 14, 30          # 13 pid-groups -> 2*13 = 26 = situ_pro in
    vNum = 2 * G                        # two vectors per pid group

    x0 = np.array(jax.random.normal(ks[0], (B, vNum, F), jnp.float32))
    pid_col = np.repeat(np.arange(G, dtype=np.float32), 2)
    x0[:, :, -1] = pid_col[None, :]
    x0[:, :, 4] = 1.0

    pos_np, vel_np, psi_np = extract_groups(x0)       # (B,G,2),(B,G,2),(B,G)
    assert pos_np.shape == (B, G, 2)

    # situ_pro: Linear(26, 2)
    w_situ, b_situ = default_linear(ks[1], 2 * G, 2)

    # TODO(synk): VectorNetWithPredicting and rnn_model are not defined in the
    # provided source; their trajectory outputs are replaced by deterministic
    # stand-in tensors of shape (B, 30, 2).
    vec_pre = jax.random.normal(ks[2], (B, T, 2), jnp.float32)
    predictions = jax.random.normal(ks[3], (B, T, 2), jnp.float32)

    pos = jnp.asarray(pos_np)
    vel = jnp.asarray(vel_np)
    psi = jnp.asarray(psi_np)

    # ------------------ MLP_COS (defined submodule) ------------------
    x_mlp = jax.random.normal(ks[4], (B, 256), jnp.float32)
    t_mlp = jax.random.normal(ks[5], (B, 1), jnp.float32)
    v0_mlp = jax.random.normal(ks[6], (B, 1), jnp.float32)

    w1 = kaiming_uniform_tanh(ks[7], 258, 256)
    b1 = jnp.full((1, 256), 0.001, jnp.float32)
    w5 = kaiming_uniform_tanh(ks[8], 256, 2)
    b5 = jnp.full((1, 2), 0.001, jnp.float32)

    # ------------------ single fused kernel call ------------------
    final_trace, two_pra, mlp_out = model_cos_fused_forward(
        pos, vel, psi, w_situ, b_situ, vec_pre, predictions,
        x_mlp, t_mlp, v0_mlp, w1, b1, w5, b5, use_bf16_matmul=False)
    jax.block_until_ready(final_trace)
    jax.block_until_ready(mlp_out)

    # ------------------ correctness checks ------------------
    ref_trace, ref_two = model_cos_ref(
        pos, vel, psi, w_situ, b_situ, vec_pre, predictions)
    np.testing.assert_allclose(np.asarray(final_trace), np.asarray(ref_trace),
                               rtol=1e-5, atol=1e-5)
    np.testing.assert_allclose(np.asarray(two_pra), np.asarray(ref_two),
                               rtol=1e-5, atol=1e-5)

    mlp_ref = mlp_cos_ref(x_mlp, t_mlp, v0_mlp, w1, b1, w5, b5)
    np.testing.assert_allclose(np.asarray(mlp_out), np.asarray(mlp_ref),
                               rtol=1e-4, atol=1e-4)

    print("KERNEL_OK")
</pallas_src>

<mosaic_0001>
module attributes {stable_mosaic.version = 11 : i64} {
  func.func @fused_model_cos_kernel(%arg0: i32, %arg1: memref<2x640xf32, #tpu.memory_space<vmem>>, %arg2: memref<10x256xf32, #tpu.memory_space<vmem>>, %arg3: memref<256x256xf32, #tpu.memory_space<vmem>>, %arg4: memref<2x128xf32, #tpu.memory_space<vmem>>) attributes {dimension_semantics = [#tpu.dimension_semantics<parallel>], iteration_bounds = array<i64: 1>, scalar_prefetch = 0 : i64, scratch_operands = 0 : i64, tpu.core_type = #tpu.core_type<tc>, window_params = [{transform_indices = @transform_0, window_bounds = array<i64: 2, 640>}, {pipeline_mode = #tpu.pipeline_mode<synchronous>, transform_indices = @transform_1, window_bounds = array<i64: 10, 256>}, {pipeline_mode = #tpu.pipeline_mode<synchronous>, transform_indices = @transform_2, window_bounds = array<i64: 256, 256>}, {transform_indices = @transform_3, window_bounds = array<i64: 2, 128>}]} {
    %c0 = arith.constant 0 : index
    %c512 = arith.constant 512 : index
    %0 = vector.load %arg1[%c0, %c512] : memref<2x640xf32, #tpu.memory_space<vmem>>, vector<2x13xf32>
    %c0_0 = arith.constant 0 : index
    %c525 = arith.constant 525 : index
    %1 = vector.load %arg1[%c0_0, %c525] : memref<2x640xf32, #tpu.memory_space<vmem>>, vector<2x13xf32>
    %c0_1 = arith.constant 0 : index
    %c538 = arith.constant 538 : index
    %2 = vector.load %arg1[%c0_1, %c538] : memref<2x640xf32, #tpu.memory_space<vmem>>, vector<2x13xf32>
    %c0_2 = arith.constant 0 : index
    %c551 = arith.constant 551 : index
    %3 = vector.load %arg1[%c0_2, %c551] : memref<2x640xf32, #tpu.memory_space<vmem>>, vector<2x13xf32>
    %c0_3 = arith.constant 0 : index
    %c564 = arith.constant 564 : index
    %4 = vector.load %arg1[%c0_3, %c564] : memref<2x640xf32, #tpu.memory_space<vmem>>, vector<2x13xf32>
    %5 = vector.extract_strided_slice %4 {offsets = [0, 0], sizes = [2, 1], strides = [1, 1]} : vector<2x13xf32> to vector<2x1xf32>
    %6 = vector.broadcast %5 : vector<2x1xf32> to vector<2x13xf32>
    %7 = arith.subf %4, %6 : vector<2x13xf32>
    %8 = math.absf %7 : vector<2x13xf32>
    %cst = arith.constant 2.700000e+00 : f32
    %9 = vector.broadcast %cst : f32 to vector<2x13xf32>
    %10 = arith.cmpf olt, %8, %9 : vector<2x13xf32>
    %cst_4 = arith.constant 3.500000e+00 : f32
    %11 = vector.broadcast %cst_4 : f32 to vector<2x13xf32>
    %12 = arith.cmpf ogt, %8, %11 : vector<2x13xf32>
    %13 = arith.ori %10, %12 : vector<2x13xi1>
    %14 = vector.extract_strided_slice %0 {offsets = [0, 0], sizes = [2, 1], strides = [1, 1]} : vector<2x13xf32> to vector<2x1xf32>
    %15 = vector.broadcast %14 : vector<2x1xf32> to vector<2x13xf32>
    %16 = arith.subf %0, %15 : vector<2x13xf32>
    %17 = vector.extract_strided_slice %1 {offsets = [0, 0], sizes = [2, 1], strides = [1, 1]} : vector<2x13xf32> to vector<2x1xf32>
    %18 = vector.broadcast %17 : vector<2x1xf32> to vector<2x13xf32>
    %19 = arith.subf %1, %18 : vector<2x13xf32>
    %20 = arith.mulf %16, %16 : vector<2x13xf32>
    %21 = arith.mulf %19, %19 : vector<2x13xf32>
    %22 = arith.addf %20, %21 : vector<2x13xf32>
    %23 = math.sqrt %22 : vector<2x13xf32>
    %cst_5 = arith.constant 0.000000e+00 : f32
    %24 = vector.broadcast %cst_5 : f32 to vector<2x13xf32>
    %25 = arith.subf %24, %23 : vector<2x13xf32>
    %26 = math.exp %25 : vector<2x13xf32>
    %cst_6 = arith.constant 9.35762291E-14 : f32
    %27 = vector.broadcast %cst_6 : f32 to vector<2x13xf32>
    %28 = arith.cmpf olt, %26, %27 : vector<2x13xf32>
    %cst_7 = arith.constant 0.000000e+00 : f32
    %29 = vector.broadcast %cst_7 : f32 to vector<2x13xf32>
    %30 = arith.select %28, %29, %26 : vector<2x13xi1>, vector<2x13xf32>
    %cst_8 = arith.constant 0.000000e+00 : f32
    %31 = vector.broadcast %cst_8 : f32 to vector<2x13xf32>
    %32 = arith.select %13, %30, %31 : vector<2x13xi1>, vector<2x13xf32>
    %33 = vector.extract_strided_slice %2 {offsets = [0, 0], sizes = [2, 1], strides = [1, 1]} : vector<2x13xf32> to vector<2x1xf32>
    %34 = vector.broadcast %33 : vector<2x1xf32> to vector<2x13xf32>
    %35 = arith.subf %2, %34 : vector<2x13xf32>
    %36 = vector.extract_strided_slice %3 {offsets = [0, 0], sizes = [2, 1], strides = [1, 1]} : vector<2x13xf32> to vector<2x1xf32>
    %37 = vector.broadcast %36 : vector<2x1xf32> to vector<2x13xf32>
    %38 = arith.subf %3, %37 : vector<2x13xf32>
    %39 = arith.mulf %35, %35 : vector<2x13xf32>
    %40 = arith.mulf %38, %38 : vector<2x13xf32>
    %41 = arith.addf %39, %40 : vector<2x13xf32>
    %42 = math.sqrt %41 : vector<2x13xf32>
    %c5 = arith.constant 5 : index
    %c0_9 = arith.constant 0 : index
    %43 = vector.load %arg2[%c5, %c0_9] : memref<10x256xf32, #tpu.memory_space<vmem>>, vector<1x13xf32>
    %44 = vector.broadcast %43 : vector<1x13xf32> to vector<2x13xf32>
    %45 = arith.mulf %32, %44 : vector<2x13xf32>
    %c6 = arith.constant 6 : index
    %c0_10 = arith.constant 0 : index
    %46 = vector.load %arg2[%c6, %c0_10] : memref<10x256xf32, #tpu.memory_space<vmem>>, vector<1x13xf32>
    %47 = vector.broadcast %46 : vector<1x13xf32> to vector<2x13xf32>
    %48 = arith.mulf %42, %47 : vector<2x13xf32>
    %49 = arith.addf %45, %48 : vector<2x13xf32>
    %cst_11 = arith.constant dense<0.000000e+00> : vector<2xf32>
    %50 = vector.multi_reduction <add>, %49, %cst_11 [1] : vector<2x13xf32> to vector<2xf32>
    %51 = vector.shape_cast %50 : vector<2xf32> to vector<2x1xf32>
    %c9 = arith.constant 9 : index
    %c0_12 = arith.constant 0 : index
    %52 = vector.load %arg2[%c9, %c0_12] : memref<10x256xf32, #tpu.memory_space<vmem>>, vector<1x1xf32>
    %53 = vector.broadcast %52 : vector<1x1xf32> to vector<2x1xf32>
    %54 = arith.addf %51, %53 : vector<2x1xf32>
    %c7 = arith.constant 7 : index
    %c0_13 = arith.constant 0 : index
    %55 = vector.load %arg2[%c7, %c0_13] : memref<10x256xf32, #tpu.memory_space<vmem>>, vector<1x13xf32>
    %56 = vector.broadcast %55 : vector<1x13xf32> to vector<2x13xf32>
    %57 = arith.mulf %32, %56 : vector<2x13xf32>
    %c8 = arith.constant 8 : index
    %c0_14 = arith.constant 0 : index
    %58 = vector.load %arg2[%c8, %c0_14] : memref<10x256xf32, #tpu.memory_space<vmem>>, vector<1x13xf32>
    %59 = vector.broadcast %58 : vector<1x13xf32> to vector<2x13xf32>
    %60 = arith.mulf %42, %59 : vector<2x13xf32>
    %61 = arith.addf %57, %60 : vector<2x13xf32>
    %cst_15 = arith.constant dense<0.000000e+00> : vector<2xf32>
    %62 = vector.multi_reduction <add>, %61, %cst_15 [1] : vector<2x13xf32> to vector<2xf32>
    %63 = vector.shape_cast %62 : vector<2xf32> to vector<2x1xf32>
    %c9_16 = arith.constant 9 : index
    %c1 = arith.constant 1 : index
    %64 = vector.load %arg2[%c9_16, %c1] : memref<10x256xf32, #tpu.memory_space<vmem>>, vector<1x1xf32>
    %65 = vector.broadcast %64 : vector<1x1xf32> to vector<2x1xf32>
    %66 = arith.addf %63, %65 : vector<2x1xf32>
    %67 = arith.subf %54, %66 : vector<2x1xf32>
    %68 = math.absf %67 : vector<2x1xf32>
    %cst_17 = arith.constant 0.000000e+00 : f32
    %69 = vector.broadcast %cst_17 : f32 to vector<2x1xf32>
    %70 = arith.subf %69, %68 : vector<2x1xf32>
    %71 = math.exp %70 : vector<2x1xf32>
    %cst_18 = arith.constant 0.000000e+00 : f32
    %72 = vector.broadcast %cst_18 : f32 to vector<2x1xf32>
    %73 = arith.cmpf oge, %67, %72 : vector<2x1xf32>
    %cst_19 = arith.constant 1.000000e+00 : f32
    %74 = vector.broadcast %cst_19 : f32 to vector<2x1xf32>
    %75 = arith.select %73, %74, %71 : vector<2x1xi1>, vector<2x1xf32>
    %cst_20 = arith.constant 1.000000e+00 : f32
    %76 = vector.broadcast %cst_20 : f32 to vector<2x1xf32>
    %77 = arith.addf %76, %71 : vector<2x1xf32>
    %78 = arith.divf %75, %77 : vector<2x1xf32>
    %cst_21 = arith.constant 1.000000e+00 : f32
    %79 = vector.broadcast %cst_21 : f32 to vector<2x1xf32>
    %80 = arith.subf %79, %78 : vector<2x1xf32>
    %c0_22 = arith.constant 0 : index
    %c256 = arith.constant 256 : index
    %81 = vector.load %arg1[%c0_22, %c256] : memref<2x640xf32, #tpu.memory_space<vmem>>, vector<2x128xf32>
    %82 = vector.broadcast %78 : vector<2x1xf32> to vector<2x128xf32>
    %83 = arith.mulf %82, %81 : vector<2x128xf32>
    %c0_23 = arith.constant 0 : index
    %c384 = arith.constant 384 : index
    %84 = vector.load %arg1[%c0_23, %c384] : memref<2x640xf32, #tpu.memory_space<vmem>>, vector<2x128xf32>
    %85 = vector.broadcast %80 : vector<2x1xf32> to vector<2x128xf32>
    %86 = arith.mulf %85, %84 : vector<2x128xf32>
    %87 = arith.addf %83, %86 : vector<2x128xf32>
    %c0_24 = arith.constant 0 : index
    %c0_25 = arith.constant 0 : index
    %88 = vector.load %arg1[%c0_24, %c0_25] : memref<2x640xf32, #tpu.memory_space<vmem>>, vector<2x256xf32>
    %c0_26 = arith.constant 0 : index
    %c0_27 = arith.constant 0 : index
    %89 = vector.load %arg3[%c0_26, %c0_27] : memref<256x256xf32, #tpu.memory_space<vmem>>, vector<256x256xf32>
    %cst_28 = arith.constant dense<0.000000e+00> : vector<2x256xf32>
    %90 = tpu.matmul %88, %89, %cst_28 {dimension_numbers = #tpu.dot_dimension_numbers<[1], [0], [0], [1], [0, 0, 1, 1], [], []>} : vector<2x256xf32>, vector<256x256xf32>, vector<2x256xf32> -> vector<2x256xf32>
    %c0_29 = arith.constant 0 : index
    %c577 = arith.constant 577 : index
    %91 = vector.load %arg1[%c0_29, %c577] : memref<2x640xf32, #tpu.memory_space<vmem>>, vector<2x1xf32>
    %c0_30 = arith.constant 0 : index
    %c0_31 = arith.constant 0 : index
    %92 = vector.load %arg2[%c0_30, %c0_31] : memref<10x256xf32, #tpu.memory_space<vmem>>, vector<1x256xf32>
    %93 = vector.broadcast %91 : vector<2x1xf32> to vector<2x256xf32>
    %94 = vector.broadcast %92 : vector<1x256xf32> to vector<2x256xf32>
    %95 = arith.mulf %93, %94 : vector<2x256xf32>
    %96 = arith.addf %90, %95 : vector<2x256xf32>
    %c0_32 = arith.constant 0 : index
    %c578 = arith.constant 578 : index
    %97 = vector.load %arg1[%c0_32, %c578] : memref<2x640xf32, #tpu.memory_space<vmem>>, vector<2x1xf32>
    %c1_33 = arith.constant 1 : index
    %c0_34 = arith.constant 0 : index
    %98 = vector.load %arg2[%c1_33, %c0_34] : memref<10x256xf32, #tpu.memory_space<vmem>>, vector<1x256xf32>
    %99 = vector.broadcast %97 : vector<2x1xf32> to vector<2x256xf32>
    %100 = vector.broadcast %98 : vector<1x256xf32> to vector<2x256xf32>
    %101 = arith.mulf %99, %100 : vector<2x256xf32>
    %102 = arith.addf %96, %101 : vector<2x256xf32>
    %c2 = arith.constant 2 : index
    %c0_35 = arith.constant 0 : index
    %103 = vector.load %arg2[%c2, %c0_35] : memref<10x256xf32, #tpu.memory_space<vmem>>, vector<1x256xf32>
    %104 = vector.broadcast %103 : vector<1x256xf32> to vector<2x256xf32>
    %105 = arith.addf %102, %104 : vector<2x256xf32>
    %106 = math.cos %105 : vector<2x256xf32>
    %c3 = arith.constant 3 : index
    %c0_36 = arith.constant 0 : index
    %107 = vector.load %arg2[%c3, %c0_36] : memref<10x256xf32, #tpu.memory_space<vmem>>, vector<1x256xf32>
    %108 = vector.broadcast %107 : vector<1x256xf32> to vector<2x256xf32>
    %109 = arith.mulf %106, %108 : vector<2x256xf32>
    %cst_37 = arith.constant dense<0.000000e+00> : vector<2xf32>
    %110 = vector.multi_reduction <add>, %109, %cst_37 [1] : vector<2x256xf32> to vector<2xf32>
    %111 = vector.shape_cast %110 : vector<2xf32> to vector<2x1xf32>
    %c9_38 = arith.constant 9 : index
    %c2_39 = arith.constant 2 : index
    %112 = vector.load %arg2[%c9_38, %c2_39] : memref<10x256xf32, #tpu.memory_space<vmem>>, vector<1x1xf32>
    %113 = vector.broadcast %112 : vector<1x1xf32> to vector<2x1xf32>
    %114 = arith.addf %111, %113 : vector<2x1xf32>
    %c4 = arith.constant 4 : index
    %c0_40 = arith.constant 0 : index
    %115 = vector.load %arg2[%c4, %c0_40] : memref<10x256xf32, #tpu.memory_space<vmem>>, vector<1x256xf32>
    %116 = vector.broadcast %115 : vector<1x256xf32> to vector<2x256xf32>
    %117 = arith.mulf %106, %116 : vector<2x256xf32>
    %cst_41 = arith.constant dense<0.000000e+00> : vector<2xf32>
    %118 = vector.multi_reduction <add>, %117, %cst_41 [1] : vector<2x256xf32> to vector<2xf32>
    %119 = vector.shape_cast %118 : vector<2xf32> to vector<2x1xf32>
    %c9_42 = arith.constant 9 : index
    %c3_43 = arith.constant 3 : index
    %120 = vector.load %arg2[%c9_42, %c3_43] : memref<10x256xf32, #tpu.memory_space<vmem>>, vector<1x1xf32>
    %121 = vector.broadcast %120 : vector<1x1xf32> to vector<2x1xf32>
    %122 = arith.addf %119, %121 : vector<2x1xf32>
    %123 = tpu.iota {dimensions = array<i32: 1>} : vector<2x128xi32>
    %c60_i32 = arith.constant 60 : i32
    %124 = vector.broadcast %c60_i32 : i32 to vector<2x128xi32>
    %125 = arith.cmpi eq, %123, %124 : vector<2x128xi32>
    %cst_44 = arith.constant 0.000000e+00 : f32
    %126 = vector.shape_cast %78 : vector<2x1xf32> to vector<2x1xf32>
    %127 = vector.broadcast %126 : vector<2x1xf32> to vector<2x128xf32>
    %128 = vector.broadcast %cst_44 : f32 to vector<2x128xf32>
    %129 = arith.select %125, %127, %128 : vector<2x128xi1>, vector<2x128xf32>
    %c61_i32 = arith.constant 61 : i32
    %130 = vector.broadcast %c61_i32 : i32 to vector<2x128xi32>
    %131 = arith.cmpi eq, %123, %130 : vector<2x128xi32>
    %cst_45 = arith.constant 0.000000e+00 : f32
    %132 = vector.shape_cast %80 : vector<2x1xf32> to vector<2x1xf32>
    %133 = vector.broadcast %132 : vector<2x1xf32> to vector<2x128xf32>
    %134 = vector.broadcast %cst_45 : f32 to vector<2x128xf32>
    %135 = arith.select %131, %133, %134 : vector<2x128xi1>, vector<2x128xf32>
    %136 = arith.addf %129, %135 : vector<2x128xf32>
    %c62_i32 = arith.constant 62 : i32
    %137 = vector.broadcast %c62_i32 : i32 to vector<2x128xi32>
    %138 = arith.cmpi eq, %123, %137 : vector<2x128xi32>
    %cst_46 = arith.constant 0.000000e+00 : f32
    %139 = vector.shape_cast %114 : vector<2x1xf32> to vector<2x1xf32>
    %140 = vector.broadcast %139 : vector<2x1xf32> to vector<2x128xf32>
    %141 = vector.broadcast %cst_46 : f32 to vector<2x128xf32>
    %142 = arith.select %138, %140, %141 : vector<2x128xi1>, vector<2x128xf32>
    %143 = arith.addf %136, %142 : vector<2x128xf32>
    %c63_i32 = arith.constant 63 : i32
    %144 = vector.broadcast %c63_i32 : i32 to vector<2x128xi32>
    %145 = arith.cmpi eq, %123, %144 : vector<2x128xi32>
    %cst_47 = arith.constant 0.000000e+00 : f32
    %146 = vector.shape_cast %122 : vector<2x1xf32> to vector<2x1xf32>
    %147 = vector.broadcast %146 : vector<2x1xf32> to vector<2x128xf32>
    %148 = vector.broadcast %cst_47 : f32 to vector<2x128xf32>
    %149 = arith.select %145, %147, %148 : vector<2x128xi1>, vector<2x128xf32>
    %150 = arith.addf %143, %149 : vector<2x128xf32>
    %151 = arith.addf %87, %150 : vector<2x128xf32>
    %c0_48 = arith.constant 0 : index
    %c0_49 = arith.constant 0 : index
    %152 = vector.load %arg4[%c0_48, %c0_49] : memref<2x128xf32, #tpu.memory_space<vmem>>, vector<2x128xf32>
    tpu.vector_store %arg4[%c0_48, %c0_49], %151 {strides = array<i32>} : memref<2x128xf32, #tpu.memory_space<vmem>>, vector<2x128xf32>,
    return
  }
  func.func @transform_0(%arg0: i32) -> (i32, i32) {
    %c0_i32 = arith.constant 0 : i32
    %c0_i32_0 = arith.constant 0 : i32
    return %arg0, %c0_i32 : i32, i32
  }
  func.func @transform_1(%arg0: i32) -> (i32, i32) {
    %c0_i32 = arith.constant 0 : i32
    %c0_i32_0 = arith.constant 0 : i32
    %c0_i32_1 = arith.constant 0 : i32
    return %c0_i32, %c0_i32_0 : i32, i32
  }
  func.func @transform_2(%arg0: i32) -> (i32, i32) {
    %c0_i32 = arith.constant 0 : i32
    %c0_i32_0 = arith.constant 0 : i32
    %c0_i32_1 = arith.constant 0 : i32
    return %c0_i32, %c0_i32_0 : i32, i32
  }
  func.func @transform_3(%arg0: i32) -> (i32, i32) {
    %c0_i32 = arith.constant 0 : i32
    %c0_i32_0 = arith.constant 0 : i32
    return %arg0, %c0_i32 : i32, i32
  }
}

</mosaic_0001>

<llo_original>
// kernel: tpu_custom_call.1
$region0: #{tpu_custom_call.1}
  #allocation0 [shape = 'u32[]', space=smem, size = 0x4, offset = 0x4, fixed_abs, tag = 'smem constant byte address 0x4 - core index']
  #allocation1 [shape = 'u32[144,128]{1,0:T(1,128)}', space=vmem, size = 0x12000, scoped, tag = 'internal scratch']
  %s0 = inlined_call_operand.hbm [shape: f32[2,640], index: 0, kind: input, shape index: {}]
  %s1 = inlined_call_operand.hbm [shape: f32[10,256], index: 1, kind: input, shape index: {}]
  %s2 = inlined_call_operand.hbm [shape: f32[256,256], index: 2, kind: input, shape index: {}]
  %s3 = inlined_call_operand.hbm [shape: f32[2,128], index: 3, kind: output, shape index: {}]
  %s4 = sld [smem:[#allocation0]]
  $region34: #{tpu_custom_call.1} parent=0
    _
  %s6 = ssub.s32 1, %s4
  %s7 = scalar_select 0, %s6, %s4
  $region1: #{tpu_custom_call.1} parent=0
    #allocation2 [shape = 'u8[5120]{0}', space=vmem, size = 0x1400, scoped, tag = 'input window, operand 0, single buffered']
    #allocation3 [shape = 's32[1]{0}', space=sflag, size = 0x4, scoped, tag = 'scoped memory for tpu_custom_call.1']
    #allocation4 [shape = 's32[1]{0}', space=sflag, size = 0x4, scoped, tag = 'scoped memory for tpu_custom_call.1']
    #allocation5 [shape = 'u8[16384]{0}', space=vmem, size = 0x4000, scoped, tag = 'input window, operand 1, single buffered']
    #allocation6 [shape = 's32[1]{0}', space=sflag, size = 0x4, scoped, tag = 'scoped memory for tpu_custom_call.1']
    #allocation7 [shape = 'u8[262144]{0}', space=vmem, size = 0x40000, scoped, tag = 'input window, operand 2, single buffered']
    #allocation8 [shape = 'u8[1024]{0}', space=vmem, size = 0x400, scoped, tag = 'output window, operand 0, single buffered']
    %8 = vsyncpa [#allocation3], 0
    %9 = vsyncpa [#allocation6], 0
    %10 = vsyncpa [#allocation4], 0
    // Predicated region
    $region2: #{tpu_custom_call.1} parent=1 // pred_check
      _
    $region3: #{tpu_custom_call.1} parent=1 // pred_check_branch
      %12 = sbr.rel (0) target = $region5
    $region4: #{tpu_custom_call.1} parent=1 // pred_region
      %s14 = ssub.s32 160, 160
      %15 = vsyncadd [#allocation3], %s14
      %s17 = sshll.u32 [#allocation2], 4
      %s18 = int_to_ptr.vmem [resolvable:$true] %s17
      %20 = dma.hbm_to_vmem [thread:$0]  %s0, 160, %s18, [#allocation3]
    $region5: #{tpu_custom_call.1} parent=1 // pred_fallthru
      _
    // Predicated region
    $region6: #{tpu_custom_call.1} parent=1 // pred_check
      _
    $region7: #{tpu_custom_call.1} parent=1 // pred_check_branch
      %22 = sbr.rel (0) target = $region9
    $region8: #{tpu_custom_call.1} parent=1 // pred_region
      %s24 = ssub.s32 512, 512
      %25 = vsyncadd [#allocation6], %s24
      %s26 = sshll.u32 [#allocation5], 4
      %s27 = int_to_ptr.vmem [resolvable:$true] %s26
      %32 = dma.hbm_to_vmem [thread:$0]  %s1, 512, %s27, [#allocation6], 256, 256, 16
    $region9: #{tpu_custom_call.1} parent=1 // pred_fallthru
      _
    // Predicated region
    $region10: #{tpu_custom_call.1} parent=1 // pred_check
      _
    $region11: #{tpu_custom_call.1} parent=1 // pred_check_branch
      %34 = sbr.rel (0) target = $region13
    $region12: #{tpu_custom_call.1} parent=1 // pred_region
      %s36 = ssub.s32 8192, 8192
      %37 = vsyncadd [#allocation6], %s36
      %s38 = sshll.u32 [#allocation7], 4
      %s39 = int_to_ptr.vmem [resolvable:$true] %s38
      %44 = dma.hbm_to_vmem [thread:$0]  %s2, 8192, %s39, [#allocation6], 256, 256, 16
    $region13: #{tpu_custom_call.1} parent=1 // pred_fallthru
      _
    // Predicated region
    $region14: #{tpu_custom_call.1} parent=1 // pred_check
      _
    $region15: #{tpu_custom_call.1} parent=1 // pred_check_branch
      %46 = sbr.rel (0) target = $region17
    $region16: #{tpu_custom_call.1} parent=1 // pred_region
      %47 = dma.done [#allocation3], 160
    $region17: #{tpu_custom_call.1} parent=1 // pred_fallthru
      _
    // Predicated region
    $region18: #{tpu_custom_call.1} parent=1 // pred_check
      _
    $region19: #{tpu_custom_call.1} parent=1 // pred_check_branch
      %49 = sbr.rel (0) target = $region21
    $region20: #{tpu_custom_call.1} parent=1 // pred_region
      %50 = dma.done [#allocation6], 512
    $region21: #{tpu_custom_call.1} parent=1 // pred_fallthru
      _
    // Predicated region
    $region22: #{tpu_custom_call.1} parent=1 // pred_check
      _
    $region23: #{tpu_custom_call.1} parent=1 // pred_check_branch
      %52 = sbr.rel (0) target = $region25
    $region24: #{tpu_custom_call.1} parent=1 // pred_region
      %53 = dma.done [#allocation6], 8192
    $region25: #{tpu_custom_call.1} parent=1 // pred_fallthru
      _
    %v54 = vld [vmem:[#allocation2 + $0x8] sm:$0x3]
    %56 = vset.pattern.permute.xlu0 52
    %57 = vperm.xlu0 %56, %v54
    %v58 = vpop.permute.xlu0 %57
    %v61 = vunpack.c.l.s4 269488144
    %v62 = vunpack.c.0.s8 %v61
    %v63 = vlaneseq
    %v64 = vshrl.u32 %v63, 7
    %v65 = vsub.s32 %v62, %v64
    %v66 = vrot.slane %v58, %v65
    %v67 = vsub.f32 %v54, %v66
    %v68 = vand.u32 2147483647, %v67
    %vm69 = vcmp.lt.f32.partialorder %v68, 2.7
    %vm70 = vcmp.gt.f32.partialorder %v68, 3.5
    %vm71 = vmor %vm69, %vm70
    %72 = vset.pattern.permute.xlu0 0
    %73 = vperm.xlu0 %72, %v54
    %v74 = vpop.permute.xlu0 %73
    %v77 = vunpack.c.l.s4 269488144
    %v78 = vunpack.c.0.s8 %v77
    %v79 = vlaneseq
    %v80 = vshrl.u32 %v79, 7
    %v81 = vsub.s32 %v78, %v80
    %v82 = vrot.slane %v74, %v81
    %v83 = vsub.f32 %v54, %v82
    %84 = vset.pattern.permute.xlu0 13
    %85 = vperm.xlu0 %84, %v54
    %v86 = vpop.permute.xlu0 %85
    %v89 = vunpack.c.l.s4 269488144
    %v90 = vunpack.c.0.s8 %v89
    %v91 = vlaneseq
    %v92 = vshrl.u32 %v91, 7
    %v93 = vsub.s32 %v90, %v92
    %v94 = vrot.slane %v86, %v93
    %v95 = vsub.f32 %v54, %v94
    %v96 = vmul.f32 %v83, %v83
    %v97 = vmul.f32 %v95, %v95
    %99 = vrot.lane.b32.xlu0 %v97, 115
    %v100 = vpop.permute.xlu0 %99
    %v102 = vadd.f32 %v96, %v100
    %v103 = vrsqrt.pop %v102
    %v104 = vmul.f32 %v102, %v103
    %vm105 = vcmp.eq.f32.partialorder %v102, inf
    %v106 = vsel %vm105, %v102, %v104
    %vm107 = vcmp.eq.f32.partialorder %v102, 0.0
    %v108 = vand.u32 %v102, 2147483648
    %v109 = vsel %vm107, %v108, %v106
    %v110 = vsub.f32 0.0, %v109
    %v111 = vmul.f32 %v110, 1.442695
    %v112 = vpow.pop %v111
    %vm113 = vcmp.lt.f32.partialorder %v112, 9.357623e-14
    %v114 = vsel %vm113, 0.0, %v112
    %116 = vrot.lane.b32.xlu0 %v114, 52
    %v117 = vpop.permute.xlu0 %116
    %v119 = vsel %vm71, %v117, 0.0
    %120 = vset.pattern.permute.xlu0 26
    %121 = vperm.xlu0 %120, %v54
    %v122 = vpop.permute.xlu0 %121
    %v125 = vunpack.c.l.s4 269488144
    %v126 = vunpack.c.0.s8 %v125
    %v127 = vlaneseq
    %v128 = vshrl.u32 %v127, 7
    %v129 = vsub.s32 %v126, %v128
    %v130 = vrot.slane %v122, %v129
    %v131 = vsub.f32 %v54, %v130
    %132 = vset.pattern.permute.xlu0 39
    %133 = vperm.xlu0 %132, %v54
    %v134 = vpop.permute.xlu0 %133
    %v137 = vunpack.c.l.s4 269488144
    %v138 = vunpack.c.0.s8 %v137
    %v139 = vlaneseq
    %v140 = vshrl.u32 %v139, 7
    %v141 = vsub.s32 %v138, %v140
    %v142 = vrot.slane %v134, %v141
    %v143 = vsub.f32 %v54, %v142
    %v144 = vmul.f32 %v131, %v131
    %v145 = vmul.f32 %v143, %v143
    %147 = vrot.lane.b32.xlu0 %v145, 115
    %v148 = vpop.permute.xlu0 %147
    %v150 = vadd.f32 %v144, %v148
    %v151 = vrsqrt.pop %v150
    %v152 = vmul.f32 %v150, %v151
    %vm153 = vcmp.eq.f32.partialorder %v150, inf
    %v154 = vsel %vm153, %v150, %v152
    %vm155 = vcmp.eq.f32.partialorder %v150, 0.0
    %v156 = vand.u32 %v150, 2147483648
    %v157 = vsel %vm155, %v156, %v154
    %v158 = vld [vmem:[#allocation5 + $0x5] ss:$0 sm:$0xff]
    %v161 = vunpack.c.l.s4 1983009808
    %v162 = vunpack.c.0.s8 %v161
    %v163 = vlaneseq
    %v164 = vshrl.u32 %v163, 7
    %v165 = vsub.s32 %v162, %v164
    %v166 = vrot.slane %v158, %v165
    %167 = vrot.lane.b32.xlu0 %v166, 52
    %v168 = vpop.permute.xlu0 %167
    %v170 = vmul.f32 %v119, %v168
    %v171 = vld [vmem:[#allocation5 + $0x6] ss:$0 sm:$0xff]
    %v174 = vunpack.c.l.s4 1983009808
    %v175 = vunpack.c.0.s8 %v174
    %v176 = vlaneseq
    %v177 = vshrl.u32 %v176, 7
    %v178 = vsub.s32 %v175, %v177
    %v179 = vrot.slane %v171, %v178
    %180 = vrot.lane.b32.xlu0 %v179, 26
    %v181 = vpop.permute.xlu0 %180
    %v183 = vmul.f32 %v157, %v181
    %185 = vrot.lane.b32.xlu0 %v183, 26
    %v186 = vpop.permute.xlu0 %185
    %v188 = vadd.f32 %v170, %v186
    %v191 = vunpack.c.l.s4 1983009808
    %v192 = vunpack.c.0.s8 %v191
    %v193 = vlaneseq
    %v194 = vshrl.u32 %v193, 7
    %v195 = vsub.s32 %v192, %v194
    %v196 = vrot.slane %v188, %v195
    %197 = vrot.lane.b32.xlu0 %v196, 76
    %v198 = vpop.permute.xlu0 %197
    %vm200 = vcmask 99328
    %v201 = vsel %vm200, %v198, 0.0
    %202 = vadd.xlane.f32.xlu0 %v201
    %v203 = vpop.xlane.xlu0 %202
    %v204 = vld [vmem:[#allocation5 + $0x11] ss:$0 sm:$0xff]
    %v205 = vadd.f32 %v203, %v204
    %v206 = vld [vmem:[#allocation5 + $0x7] ss:$0 sm:$0xff]
    %v209 = vunpack.c.l.s4 1983009808
    %v210 = vunpack.c.0.s8 %v209
    %v211 = vlaneseq
    %v212 = vshrl.u32 %v211, 7
    %v213 = vsub.s32 %v210, %v212
    %v214 = vrot.slane %v206, %v213
    %215 = vrot.lane.b32.xlu0 %v214, 52
    %v216 = vpop.permute.xlu0 %215
    %v218 = vmul.f32 %v119, %v216
    %v219 = vld [vmem:[#allocation5 + $0x10] ss:$0 sm:$0xff]
    %v222 = vunpack.c.l.s4 1983009808
    %v223 = vunpack.c.0.s8 %v222
    %v224 = vlaneseq
    %v225 = vshrl.u32 %v224, 7
    %v226 = vsub.s32 %v223, %v225
    %v227 = vrot.slane %v219, %v226
    %228 = vrot.lane.b32.xlu0 %v227, 26
    %v229 = vpop.permute.xlu0 %228
    %v231 = vmul.f32 %v157, %v229
    %233 = vrot.lane.b32.xlu0 %v231, 26
    %v234 = vpop.permute.xlu0 %233
    %v236 = vadd.f32 %v218, %v234
    %v239 = vunpack.c.l.s4 1983009808
    %v240 = vunpack.c.0.s8 %v239
    %v241 = vlaneseq
    %v242 = vshrl.u32 %v241, 7
    %v243 = vsub.s32 %v240, %v242
    %v244 = vrot.slane %v236, %v243
    %245 = vrot.lane.b32.xlu0 %v244, 76
    %v246 = vpop.permute.xlu0 %245
    %v248 = vsel %vm200, %v246, 0.0
    %249 = vadd.xlane.f32.xlu0 %v248
    %v250 = vpop.xlane.xlu0 %249
    %v251 = vadd.f32 %v250, %v204
    %253 = vrot.lane.b32.xlu0 %v251, 127
    %v254 = vpop.permute.xlu0 %253
    %v256 = vsub.f32 %v205, %v254
    %v257 = vand.u32 2147483647, %v256
    %v258 = vsub.f32 0.0, %v257
    %v259 = vmul.f32 %v258, 1.442695
    %v260 = vpow.pop %v259
    %vm261 = vcmp.ge.f32.partialorder %v256, 0.0
    %v262 = vsel %vm261, 1.0, %v260
    %v263 = vadd.f32 %v260, 1.0
    %v264 = vrcp.pop %v263
    %v265 = vmul.f32 %v262, %v264
    %v266 = vsub.f32 1.0, %v265
    %v267 = vld [vmem:[#allocation2 + $0x4] sm:$0x3]
    %269 = vset.pattern.permute.xlu0 0
    %270 = vperm.xlu0 %269, %v265
    %v271 = vpop.permute.xlu0 %270
    %v273 = vmul.f32 %v271, %v267
    %v274 = vld [vmem:[#allocation2 + $0x6] sm:$0x3]
    %276 = vset.pattern.permute.xlu0 0
    %277 = vperm.xlu0 %276, %v266
    %v278 = vpop.permute.xlu0 %277
    %v280 = vmul.f32 %v278, %v274
    %v281 = vadd.f32 %v273, %v280
    %v282 = vld [vmem:[#allocation2] sm:$0xf]
    %v283 = vld [vmem:[#allocation7] sm:$0xff]
    %v284 = vld [vmem:[#allocation7 + $0x8] sm:$0xff]
    %v285 = vld [vmem:[#allocation7 + $0x10] sm:$0xff]
    %v286 = vld [vmem:[#allocation7 + $0x18] sm:$0xff]
    %v287 = vld [vmem:[#allocation7 + $0x20] sm:$0xff]
    %v288 = vld [vmem:[#allocation7 + $0x28] sm:$0xff]
    %v289 = vld [vmem:[#allocation7 + $0x30] sm:$0xff]
    %v290 = vld [vmem:[#allocation7 + $0x38] sm:$0xff]
    %v291 = vld [vmem:[#allocation7 + $0x40] sm:$0xff]
    %v292 = vld [vmem:[#allocation7 + $0x48] sm:$0xff]
    %v293 = vld [vmem:[#allocation7 + $0x50] sm:$0xff]
    %v294 = vld [vmem:[#allocation7 + $0x58] sm:$0xff]
    %v295 = vld [vmem:[#allocation7 + $0x60] sm:$0xff]
    %v296 = vld [vmem:[#allocation7 + $0x68] sm:$0xff]
    %v297 = vld [vmem:[#allocation7 + $0x70] sm:$0xff]
    %v298 = vld [vmem:[#allocation7 + $0x78] sm:$0xff]
    %v299 = vld [vmem:[#allocation7 + $0x80] sm:$0xff]
    %v300 = vld [vmem:[#allocation7 + $0x88] sm:$0xff]
    %v301 = vld [vmem:[#allocation7 + $0x90] sm:$0xff]
    %v302 = vld [vmem:[#allocation7 + $0x98] sm:$0xff]
    %v303 = vld [vmem:[#allocation7 + $0xa0] sm:$0xff]
    %v304 = vld [vmem:[#allocation7 + $0xa8] sm:$0xff]
    %v305 = vld [vmem:[#allocation7 + $0xb0] sm:$0xff]
    %v306 = vld [vmem:[#allocation7 + $0xb8] sm:$0xff]
    %v307 = vld [vmem:[#allocation7 + $0xc0] sm:$0xff]
    %v308 = vld [vmem:[#allocation7 + $0xc8] sm:$0xff]
    %v309 = vld [vmem:[#allocation7 + $0xd0] sm:$0xff]
    %v310 = vld [vmem:[#allocation7 + $0xd8] sm:$0xff]
    %v311 = vld [vmem:[#allocation7 + $0xe0] sm:$0xff]
    %v312 = vld [vmem:[#allocation7 + $0xe8] sm:$0xff]
    %v313 = vld [vmem:[#allocation7 + $0xf0] sm:$0xff]
    %v314 = vld [vmem:[#allocation7 + $0xf8] sm:$0xff]
    %v315 = vld [vmem:[#allocation7 + $0x100] sm:$0xff]
    %v316 = vld [vmem:[#allocation7 + $0x108] sm:$0xff]
    %v317 = vld [vmem:[#allocation7 + $0x110] sm:$0xff]
    %v318 = vld [vmem:[#allocation7 + $0x118] sm:$0xff]
    %v319 = vld [vmem:[#allocation7 + $0x120] sm:$0xff]
    %v320 = vld [vmem:[#allocation7 + $0x128] sm:$0xff]
    %v321 = vld [vmem:[#allocation7 + $0x130] sm:$0xff]
    %v322 = vld [vmem:[#allocation7 + $0x138] sm:$0xff]
    %v323 = vld [vmem:[#allocation7 + $0x140] sm:$0xff]
    %v324 = vld [vmem:[#allocation7 + $0x148] sm:$0xff]
    %v325 = vld [vmem:[#allocation7 + $0x150] sm:$0xff]
    %v326 = vld [vmem:[#allocation7 + $0x158] sm:$0xff]
    %v327 = vld [vmem:[#allocation7 + $0x160] sm:$0xff]
    %v328 = vld [vmem:[#allocation7 + $0x168] sm:$0xff]
    %v329 = vld [vmem:[#allocation7 + $0x170] sm:$0xff]
    %v330 = vld [vmem:[#allocation7 + $0x178] sm:$0xff]
    %v331 = vld [vmem:[#allocation7 + $0x180] sm:$0xff]
    %v332 = vld [vmem:[#allocation7 + $0x188] sm:$0xff]
    %v333 = vld [vmem:[#allocation7 + $0x190] sm:$0xff]
    %v334 = vld [vmem:[#allocation7 + $0x198] sm:$0xff]
    %v335 = vld [vmem:[#allocation7 + $0x1a0] sm:$0xff]
    %v336 = vld [vmem:[#allocation7 + $0x1a8] sm:$0xff]
    %v337 = vld [vmem:[#allocation7 + $0x1b0] sm:$0xff]
    %v338 = vld [vmem:[#allocation7 + $0x1b8] sm:$0xff]
    %v339 = vld [vmem:[#allocation7 + $0x1c0] sm:$0xff]
    %v340 = vld [vmem:[#allocation7 + $0x1c8] sm:$0xff]
    %v341 = vld [vmem:[#allocation7 + $0x1d0] sm:$0xff]
    %v342 = vld [vmem:[#allocation7 + $0x1d8] sm:$0xff]
    %v343 = vld [vmem:[#allocation7 + $0x1e0] sm:$0xff]
    %v344 = vld [vmem:[#allocation7 + $0x1e8] sm:$0xff]
    %v345 = vld [vmem:[#allocation7 + $0x1f0] sm:$0xff]
    %v346 = vld [vmem:[#allocation7 + $0x1f8] sm:$0xff]
    %v347 = vld [vmem:[#allocation2 + $0x8] sm:$0x3]
    %v348 = vld [vmem:[#allocation5] ss:$8 sm:$0x3]
    %350 = vset.pattern.permute.xlu0 65
    %351 = vperm.xlu0 %350, %v347
    %v352 = vpop.permute.xlu0 %351
    %v355 = vunpack.c.l.s4 269488144
    %v356 = vunpack.c.0.s8 %v355
    %v357 = vlaneseq
    %v358 = vshrl.u32 %v357, 7
    %v359 = vsub.s32 %v356, %v358
    %v360 = vrot.slane %v352, %v359
    %v362 = vlaneseq
    %v363 = vshrl.u32 %v362, 7
    %v364 = vsub.s32 0, %v363
    %v365 = vrot.slane %v348, %v364
    %v366 = vlaneseq
    %v367 = vshrl.u32 %v366, 7
    %v368 = vsub.s32 1, %v367
    %v369 = vrot.slane %v348, %v368
    %v370 = vcombine.low %v365, %v369
    %v372 = vunpack.c.l.s4 1983009808
    %v373 = vunpack.c.0.s8 %v372
    %v374 = vlaneseq
    %v375 = vshrl.u32 %v374, 7
    %v376 = vsub.s32 %v373, %v375
    %v377 = vrot.slane %v370, %v376
    %v379 = vmul.f32 %v360, %v377
    %v382 = vunpack.c.l.s4 1983009808
    %v383 = vunpack.c.0.s8 %v382
    %v384 = vlaneseq
    %v385 = vshrl.u32 %v384, 7
    %v386 = vsub.s32 %v383, %v385
    %v387 = vrot.slane %v282, %v386
    %v388 = vcombine.high %v387, %v387
    %v393 = vunpack.c.l.s4 1983009808
    %v394 = vunpack.c.0.s8 %v393
    %v395 = vlaneseq
    %v396 = vshrl.u32 %v395, 7
    %v397 = vsub.s32 %v394, %v396
    %v398 = vrot.slane %v379, %v397
    %v399 = vcombine.high %v398, %v398
    %402 = vmatprep.subr.mxu0 %v284
    %403 = vmatpush1.msra.mxu0 %v283
    %404 = vmatprep.subr.mxu0 %v286
    %405 = vmatpush1.msra.mxu0 %v285
    %406 = vmatprep.subr.mxu0 %v288
    %407 = vmatpush1.msra.mxu0 %v287
    %408 = vmatprep.subr.mxu0 %v290
    %409 = vmatpush1.msra.mxu0 %v289
    %410 = vmatprep.subr.mxu0 %v292
    %411 = vmatpush1.msra.mxu0 %v291
    %412 = vmatprep.subr.mxu0 %v294
    %413 = vmatpush1.msra.mxu0 %v293
    %414 = vmatprep.subr.mxu0 %v296
    %415 = vmatpush1.msra.mxu0 %v295
    %416 = vmatprep.subr.mxu0 %v298
    %417 = vmatpush1.msra.mxu0 %v297
    %418 = vmatprep.subr.mxu0 %v300
    %419 = vmatpush1.msra.mxu0 %v299
    %420 = vmatprep.subr.mxu0 %v302
    %421 = vmatpush1.msra.mxu0 %v301
    %422 = vmatprep.subr.mxu0 %v304
    %423 = vmatpush1.msra.mxu0 %v303
    %424 = vmatprep.subr.mxu0 %v306
    %425 = vmatpush1.msra.mxu0 %v305
    %426 = vmatprep.subr.mxu0 %v308
    %427 = vmatpush1.msra.mxu0 %v307
    %428 = vmatprep.subr.mxu0 %v310
    %429 = vmatpush1.msra.mxu0 %v309
    %430 = vmatprep.subr.mxu0 %v312
    %431 = vmatpush1.msra.mxu0 %v311
    %432 = vmatprep.subr.mxu0 %v314
    %433 = vmatpush1.msra.mxu0 %v313
    %434 = vmatprep.subr.mxu0 %v316
    %435 = vmatpush1.msra.mxu0 %v315
    %436 = vmatprep.subr.mxu0 %v318
    %437 = vmatpush1.msra.mxu0 %v317
    %438 = vmatprep.subr.mxu0 %v320
    %439 = vmatpush1.msra.mxu0 %v319
    %440 = vmatprep.subr.mxu0 %v322
    %441 = vmatpush1.msra.mxu0 %v321
    %442 = vmatprep.subr.mxu0 %v324
    %443 = vmatpush1.msra.mxu0 %v323
    %444 = vmatprep.subr.mxu0 %v326
    %445 = vmatpush1.msra.mxu0 %v325
    %446 = vmatprep.subr.mxu0 %v328
    %447 = vmatpush1.msra.mxu0 %v327
    %448 = vmatprep.subr.mxu0 %v330
    %449 = vmatpush1.msra.mxu0 %v329
    %450 = vmatprep.subr.mxu0 %v332
    %451 = vmatpush1.msra.mxu0 %v331
    %452 = vmatprep.subr.mxu0 %v334
    %453 = vmatpush1.msra.mxu0 %v333
    %454 = vmatprep.subr.mxu0 %v336
    %455 = vmatpush1.msra.mxu0 %v335
    %456 = vmatprep.subr.mxu0 %v338
    %457 = vmatpush1.msra.mxu0 %v337
    %458 = vmatprep.subr.mxu0 %v340
    %459 = vmatpush1.msra.mxu0 %v339
    %460 = vmatprep.subr.mxu0 %v342
    %461 = vmatpush1.msra.mxu0 %v341
    %462 = vmatprep.subr.mxu0 %v344
    %463 = vmatpush1.msra.mxu0 %v343
    %464 = vmatprep.subr.mxu0 %v346
    %465 = vmatpush1.msra.mxu0 %v345
    %466 = vmatprep.mubr.f32.mxu0 %v388
    %467 = vmatmul.mubr.f32.gmra.mrb[0].mxu0 %v387
    %v468 = vpop.f32.mrb[0].mxu0
    %v469 = vadd.f32 %v398, %v468
    %v470 = vpop.f32.mrb[0].mxu0
    %v471 = vadd.f32 %v399, %v470
    %472 = vdwg.mxu0
    %v473 = vld [vmem:[#allocation2 + $0x8] sm:$0x3]
    %s474 = scalar_lea.vmem [#allocation5], 1
    %v475 = vld [vmem:[%s474] ss:$8 sm:$0x3]
    %477 = vset.pattern.permute.xlu0 66
    %478 = vperm.xlu0 %477, %v473
    %v479 = vpop.permute.xlu0 %478
    %v482 = vunpack.c.l.s4 269488144
    %v483 = vunpack.c.0.s8 %v482
    %v484 = vlaneseq
    %v485 = vshrl.u32 %v484, 7
    %v486 = vsub.s32 %v483, %v485
    %v487 = vrot.slane %v479, %v486
    %v489 = vlaneseq
    %v490 = vshrl.u32 %v489, 7
    %v491 = vsub.s32 0, %v490
    %v492 = vrot.slane %v475, %v491
    %v493 = vlaneseq
    %v494 = vshrl.u32 %v493, 7
    %v495 = vsub.s32 1, %v494
    %v496 = vrot.slane %v475, %v495
    %v497 = vcombine.low %v492, %v496
    %v499 = vunpack.c.l.s4 1983009808
    %v500 = vunpack.c.0.s8 %v499
    %v501 = vlaneseq
    %v502 = vshrl.u32 %v501, 7
    %v503 = vsub.s32 %v500, %v502
    %v504 = vrot.slane %v497, %v503
    %v506 = vmul.f32 %v487, %v504
    %v509 = vunpack.c.l.s4 1983009808
    %v510 = vunpack.c.0.s8 %v509
    %v511 = vlaneseq
    %v512 = vshrl.u32 %v511, 7
    %v513 = vsub.s32 %v510, %v512
    %v514 = vrot.slane %v506, %v513
    %v515 = vcombine.high %v514, %v514
    %v518 = vadd.f32 %v469, %v514
    %v519 = vadd.f32 %v471, %v515
    %s520 = scalar_lea.vmem [#allocation5], 2
    %v521 = vld [vmem:[%s520] ss:$8 sm:$0x3]
    %v523 = vlaneseq
    %v524 = vshrl.u32 %v523, 7
    %v525 = vsub.s32 0, %v524
    %v526 = vrot.slane %v521, %v525
    %v527 = vlaneseq
    %v528 = vshrl.u32 %v527, 7
    %v529 = vsub.s32 1, %v528
    %v530 = vrot.slane %v521, %v529
    %v533 = vadd.f32 %v518, %v526
    %v534 = vadd.f32 %v519, %v530
    %v535 = vand.u32 2147483647, %v533
    %vm536 = vcmp.le.f32.partialorder %v535, 0.7853982
    %vm537 = vcmp.lt.s32.totalorder %v533, 0
    %v538 = vand.u32 %v533, 2139095040
    %v539 = vshrl.u32 %v538, 23
    %v540 = vsub.s32 %v539, 127
    %v541 = vand.u32 2147483647, %v533
    %v542 = vand.u32 %v541, 8388607
    %v543 = vor.u32 %v542, 8388608
    %v544 = vsub.s32 0, %v543
    %v545 = vadd.s32 %v540, 1
    %vm546 = vcmp.gt.s32.totalorder %v545, 0
    %v547 = vsel %vm546, %v545, 0
    %v548 = vshrl.u32 %v547, 5
    %v549 = vand.u32 %v547, 31
    %v550 = vsub.s32 32, %v549
    %v551 = vshrl.u32 683565275, %v550
    %v552 = vshll.u32 683565275, %v549
    %v553 = vshrl.u32 2475754826, %v550
    %v554 = vor.u32 %v552, %v553
    %v555 = vshll.u32 2475754826, %v549
    %v556 = vshrl.u32 2131351028, %v550
    %v557 = vor.u32 %v555, %v556
    %v558 = vshll.u32 2131351028, %v549
    %v559 = vshrl.u32 2102212464, %v550
    %v560 = vor.u32 %v558, %v559
    %v561 = vshll.u32 2102212464, %v549
    %v562 = vshrl.u32 920167782, %v550
    %v563 = vor.u32 %v561, %v562
    %v564 = vshll.u32 920167782, %v549
    %v565 = vshrl.u32 1326507024, %v550
    %v566 = vor.u32 %v564, %v565
    %vm567 = vcmp.lt.s32.totalorder %v548, 1
    %vm568 = vcmp.lt.s32.totalorder %v548, 2
    %vm569 = vcmp.lt.s32.totalorder %v548, 3
    %vm570 = vcmp.lt.s32.totalorder %v548, 4
    %v571 = vsel %vm567, %v551, %v554
    %v572 = vsel %vm570, %v560, 2102212464
    %v573 = vsel %vm569, %v557, %v572
    %v574 = vsel %vm568, %v571, %v573
    %v575 = vsel %vm567, %v554, %v557
    %v576 = vsel %vm570, %v563, 920167782
    %v577 = vsel %vm569, %v560, %v576
    %v578 = vsel %vm568, %v575, %v577
    %v579 = vsel %vm567, %v557, %v560
    %v580 = vsel %vm570, %v566, 1326507024
    %v581 = vsel %vm569, %v563, %v580
    %v582 = vsel %vm568, %v579, %v581
    %v583 = vshll.u32 %v543, 8
    %v584 = vmul.u32.u64.compose %v583, %v582
    %v585 = vextract.low.u32 %v584
    %v586 = vextract.high.u32 %v584
    %v587 = vmul.u32.u64.compose %v583, %v578
    %v588 = vextract.low.u32 %v587
    %v589 = vextract.high.u32 %v587
    %v590 = vmul.u32 %v583, %v574
    %v591 = vadd.s32 %v586, %v588
    %vm592 = vc.u32 %v586, %v588
    %v593 = vadd.s32 %v589, 1
    %v594 = vsel %vm592, %v593, %v589
    %v595 = vadd.s32 %v590, %v594
    %v596 = vadd.s32 %v595, 536870912
    %v597 = vshrl.u32 %v596, 30
    %v598 = vshll.u32 %v597, 30
    %v599 = vsub.s32 %v595, %v598
    %vm600 = vcmp.lt.s32.totalorder %v599, 0
    %v601 = vsub.s32 0, %v599
    %v602 = vsel %vm600, %v601, %v599
    %v603 = vclz %v602
    %v604 = vsub.s32 %v603, 2
    %vm605 = vcmp.gt.s32.totalorder 0, %v604
    %v606 = vsel %vm605, 0, %v604
    %v607 = vsub.s32 32, %v606
    %v608 = vshll.u32 %v599, %v606
    %v609 = vshrl.u32 %v591, %v607
    %v610 = vor.u32 %v608, %v609
    %v611 = vsub.s32 4294967266, %v606
    %v612 = vadd.s32 %v611, 127
    %v613 = vshll.u32 %v612, 23
    %v614 = vor.u32 4788187, %v613
    %v615 = vand.u32 2147483647, %v614
    %v617 = vcvt.s32.f32 %v610
    %v618 = vmul.f32 %v617, %v615
    %v619 = vxor.u32 %v618, 2147483648
    %v620 = vsel %vm537, %v619, %v618
    %v621 = vsub.s32 4, %v597
    %v622 = vsel %vm537, %v621, %v597
    %v623 = vsel %vm536, %v533, %v620
    %v624 = vsel %vm536, 0, %v622
    %v625 = vcosq.f32.pop %v623
    %v626 = vsinq.f32.pop %v623
    %vm627 = vweird.f32 %v533
    %v628 = vand.u32 %v624, 3
    %vm629 = vcmp.lt.s32.totalorder %v628, 2
    %vm630 = vcmp.eq.s32.totalorder %v628, 0
    %v631 = vxor.u32 %v626, 2147483648
    %v632 = vsel %vm630, %v625, %v631
    %vm633 = vcmp.eq.s32.totalorder %v628, 2
    %v634 = vxor.u32 %v625, 2147483648
    %v635 = vsel %vm633, %v634, %v626
    %v636 = vsel %vm629, %v632, %v635
    %v637 = vsel %vm627, nan, %v636
    %v638 = vand.u32 2147483647, %v534
    %vm639 = vcmp.le.f32.partialorder %v638, 0.7853982
    %vm640 = vcmp.lt.s32.totalorder %v534, 0
    %v641 = vand.u32 %v534, 2139095040
    %v642 = vshrl.u32 %v641, 23
    %v643 = vsub.s32 %v642, 127
    %v644 = vand.u32 2147483647, %v534
    %v645 = vand.u32 %v644, 8388607
    %v646 = vor.u32 %v645, 8388608
    %v647 = vsub.s32 0, %v646
    %v648 = vadd.s32 %v643, 1
    %vm649 = vcmp.gt.s32.totalorder %v648, 0
    %v650 = vsel %vm649, %v648, 0
    %v651 = vshrl.u32 %v650, 5
    %v652 = vand.u32 %v650, 31
    %v653 = vsub.s32 32, %v652
    %v654 = vshrl.u32 683565275, %v653
    %v655 = vshll.u32 683565275, %v652
    %v656 = vshrl.u32 2475754826, %v653
    %v657 = vor.u32 %v655, %v656
    %v658 = vshll.u32 2475754826, %v652
    %v659 = vshrl.u32 2131351028, %v653
    %v660 = vor.u32 %v658, %v659
    %v661 = vshll.u32 2131351028, %v652
    %v662 = vshrl.u32 2102212464, %v653
    %v663 = vor.u32 %v661, %v662
    %v664 = vshll.u32 2102212464, %v652
    %v665 = vshrl.u32 920167782, %v653
    %v666 = vor.u32 %v664, %v665
    %v667 = vshll.u32 920167782, %v652
    %v668 = vshrl.u32 1326507024, %v653
    %v669 = vor.u32 %v667, %v668
    %vm670 = vcmp.lt.s32.totalorder %v651, 1
    %vm671 = vcmp.lt.s32.totalorder %v651, 2
    %vm672 = vcmp.lt.s32.totalorder %v651, 3
    %vm673 = vcmp.lt.s32.totalorder %v651, 4
    %v674 = vsel %vm670, %v654, %v657
    %v675 = vsel %vm673, %v663, 2102212464
    %v676 = vsel %vm672, %v660, %v675
    %v677 = vsel %vm671, %v674, %v676
    %v678 = vsel %vm670, %v657, %v660
    %v679 = vsel %vm673, %v666, 920167782
    %v680 = vsel %vm672, %v663, %v679
    %v681 = vsel %vm671, %v678, %v680
    %v682 = vsel %vm670, %v660, %v663
    %v683 = vsel %vm673, %v669, 1326507024
    %v684 = vsel %vm672, %v666, %v683
    %v685 = vsel %vm671, %v682, %v684
    %v686 = vshll.u32 %v646, 8
    %v687 = vmul.u32.u64.compose %v686, %v685
    %v688 = vextract.low.u32 %v687
    %v689 = vextract.high.u32 %v687
    %v690 = vmul.u32.u64.compose %v686, %v681
    %v691 = vextract.low.u32 %v690
    %v692 = vextract.high.u32 %v690
    %v693 = vmul.u32 %v686, %v677
    %v694 = vadd.s32 %v689, %v691
    %vm695 = vc.u32 %v689, %v691
    %v696 = vadd.s32 %v692, 1
    %v697 = vsel %vm695, %v696, %v692
    %v698 = vadd.s32 %v693, %v697
    %v699 = vadd.s32 %v698, 536870912
    %v700 = vshrl.u32 %v699, 30
    %v701 = vshll.u32 %v700, 30
    %v702 = vsub.s32 %v698, %v701
    %vm703 = vcmp.lt.s32.totalorder %v702, 0
    %v704 = vsub.s32 0, %v702
    %v705 = vsel %vm703, %v704, %v702
    %v706 = vclz %v705
    %v707 = vsub.s32 %v706, 2
    %vm708 = vcmp.gt.s32.totalorder 0, %v707
    %v709 = vsel %vm708, 0, %v707
    %v710 = vsub.s32 32, %v709
    %v711 = vshll.u32 %v702, %v709
    %v712 = vshrl.u32 %v694, %v710
    %v713 = vor.u32 %v711, %v712
    %v714 = vsub.s32 4294967266, %v709
    %v715 = vadd.s32 %v714, 127
    %v716 = vshll.u32 %v715, 23
    %v717 = vor.u32 4788187, %v716
    %v718 = vand.u32 2147483647, %v717
    %v720 = vcvt.s32.f32 %v713
    %v721 = vmul.f32 %v720, %v718
    %v722 = vxor.u32 %v721, 2147483648
    %v723 = vsel %vm640, %v722, %v721
    %v724 = vsub.s32 4, %v700
    %v725 = vsel %vm640, %v724, %v700
    %v726 = vsel %vm639, %v534, %v723
    %v727 = vsel %vm639, 0, %v725
    %v728 = vcosq.f32.pop %v726
    %v729 = vsinq.f32.pop %v726
    %vm730 = vweird.f32 %v534
    %v731 = vand.u32 %v727, 3
    %vm732 = vcmp.lt.s32.totalorder %v731, 2
    %vm733 = vcmp.eq.s32.totalorder %v731, 0
    %v734 = vxor.u32 %v729, 2147483648
    %v735 = vsel %vm733, %v728, %v734
    %vm736 = vcmp.eq.s32.totalorder %v731, 2
    %v737 = vxor.u32 %v728, 2147483648
    %v738 = vsel %vm736, %v737, %v729
    %v739 = vsel %vm732, %v735, %v738
    %v740 = vsel %vm730, nan, %v739
    %s741 = scalar_lea.vmem [#allocation5], 3
    %v742 = vld [vmem:[%s741] ss:$8 sm:$0x3]
    %v744 = vlaneseq
    %v745 = vshrl.u32 %v744, 7
    %v746 = vsub.s32 0, %v745
    %v747 = vrot.slane %v742, %v746
    %v748 = vlaneseq
    %v749 = vshrl.u32 %v748, 7
    %v750 = vsub.s32 1, %v749
    %v751 = vrot.slane %v742, %v750
    %v754 = vmul.f32 %v637, %v747
    %v755 = vmul.f32 %v740, %v751
    %vm756 = vcmask 1041408
    %v757 = vsel %vm756, %v754, 0.0
    %v758 = vsel %vm756, %v755, 0.0
    %v759 = vadd.f32 %v757, %v758
    %760 = vadd.xlane.f32.xlu0 %v759
    %v761 = vpop.xlane.xlu0 %760
    %v762 = vld [vmem:[#allocation5 + $0x11] ss:$0 sm:$0xff]
    %v763 = vadd.f32 %v761, %v762
    %s764 = scalar_lea.vmem [#allocation5], 4
    %v765 = vld [vmem:[%s764] ss:$8 sm:$0x3]
    %v767 = vlaneseq
    %v768 = vshrl.u32 %v767, 7
    %v769 = vsub.s32 0, %v768
    %v770 = vrot.slane %v765, %v769
    %v771 = vlaneseq
    %v772 = vshrl.u32 %v771, 7
    %v773 = vsub.s32 1, %v772
    %v774 = vrot.slane %v765, %v773
    %v777 = vmul.f32 %v637, %v770
    %v778 = vmul.f32 %v740, %v774
    %v779 = vsel %vm756, %v777, 0.0
    %v780 = vsel %vm756, %v778, 0.0
    %v781 = vadd.f32 %v779, %v780
    %782 = vadd.xlane.f32.xlu0 %v781
    %v783 = vpop.xlane.xlu0 %782
    %v784 = vadd.f32 %v783, %v762
    %v785 = vlaneseq
    %v786 = vand.u32 %v785, 127
    %vm787 = vcmp.eq.s32.totalorder %v786, 60
    %v788 = vsel %vm787, %v271, 0.0
    %vm789 = vcmp.eq.s32.totalorder %v786, 61
    %v790 = vsel %vm789, %v278, 0.0
    %v791 = vadd.f32 %v788, %v790
    %vm792 = vcmp.eq.s32.totalorder %v786, 62
    %794 = vset.pattern.permute.xlu0 2
    %795 = vperm.xlu0 %794, %v763
    %v796 = vpop.permute.xlu0 %795
    %v798 = vsel %vm792, %v796, 0.0
    %v799 = vadd.f32 %v791, %v798
    %vm800 = vcmp.eq.s32.totalorder %v786, 63
    %802 = vset.pattern.permute.xlu0 3
    %803 = vperm.xlu0 %802, %v784
    %v804 = vpop.permute.xlu0 %803
    %v806 = vsel %vm800, %v804, 0.0
    %v807 = vadd.f32 %v799, %v806
    %v808 = vadd.f32 %v281, %v807
    %809 = vst [vmem:[#allocation8] sm:$0x3] %v808
    // Predicated region
    $region26: #{tpu_custom_call.1} parent=1 // pred_check
      _
    $region27: #{tpu_custom_call.1} parent=1 // pred_check_branch
      %811 = sbr.rel (0) target = $region29
    $region28: #{tpu_custom_call.1} parent=1 // pred_region
      %s813 = ssub.s32 32, 32
      %814 = vsyncadd [#allocation4], %s813
      %s816 = sshll.u32 [#allocation8], 4
      %s817 = int_to_ptr.vmem [resolvable:$true] %s816
      %819 = dma.vmem_to_hbm [thread:$0]  %s817, 32, %s3, [#allocation4]
    $region29: #{tpu_custom_call.1} parent=1 // pred_fallthru
      _
    // Predicated region
    $region30: #{tpu_custom_call.1} parent=1 // pred_check
      _
    $region31: #{tpu_custom_call.1} parent=1 // pred_check_branch
      %821 = sbr.rel (0) target = $region33
    $region32: #{tpu_custom_call.1} parent=1 // pred_region
      %822 = dma.done [#allocation4], 32
    $region33: #{tpu_custom_call.1} parent=1 // pred_fallthru
      _
    %823 = vsyncpa [#allocation3], 1
    %824 = vsyncpa [#allocation6], 1
    %825 = vsyncpa [#allocation4], 1

</llo_original>
